<compile_context>
chip_gen: v6e
topology: v6e:2x2x1
jax: 0.10.0
libtpu: 0.0.40
codegen_flags: <defaults>
</compile_context>

<pallas_src>
import functools

import jax
import jax.numpy as jnp
from jax.experimental import pallas as pl
from jax.experimental.pallas import tpu as pltpu

_LANE = 128      # lane width (last-dim granularity)
_SUBLANE_BF16 = 16  # bf16 sublane packing (second-to-last dim granularity)


def _round_up(n, m):
    return ((n + m - 1) // m) * m


# -----------------------------------------------------------------------------
# Pallas kernel: K-tiled projection + fused (Linear+ReLU)x3 + fc head
# -----------------------------------------------------------------------------
def _mlp_kernel(
    x_ref,                     # (bm, bk)  bf16 input-feature tile
    w_proj_ref, b_proj_ref,    # (bk, E) bf16, (1, E) f32
    w1_ref, b1_ref,            # (E, E)  bf16, (1, E) f32
    w2_ref, b2_ref,
    w3_ref, b3_ref,
    w_fc_ref, b_fc_ref,        # (E, C)  bf16, (1, C) f32
    logits_ref,                # (bm, C) f32 output tile
    acc_ref,                   # (bm, E) f32 scratch: running projection acc
):
    k = pl.program_id(1)

    # Stream one (bm, bk) x (bk, E) chunk of the projection matmul
    # (bf16 MXU, f32 accumulation).
    partial = jnp.dot(x_ref[...], w_proj_ref[...],
                      preferred_element_type=jnp.float32)

    @pl.when(k == 0)
    def _init():
        # First chunk: write directly (no zero-fill) and fold in the bias.
        acc_ref[...] = partial + b_proj_ref[...]

    @pl.when(k != 0)
    def _accumulate():
        acc_ref[...] += partial

    # Epilogue on the last K step: 3x(Linear+ReLU), fc head.
    # TODO(synk): for very large embed (E >= ~2048) the three resident (E,E)
    # epilogue weights become the VMEM limiter on v7x; a column-tiled epilogue
    # would be needed there.
    @pl.when(k == pl.num_programs(1) - 1)
    def _epilogue():
        h = acc_ref[...]
        for w_ref, b_ref in ((w1_ref, b1_ref), (w2_ref, b2_ref),
                             (w3_ref, b3_ref)):
            h = jnp.dot(h.astype(w_ref.dtype), w_ref[...],
                        preferred_element_type=jnp.float32)
            h = jnp.maximum(h + b_ref[...], 0.0)
        logits = jnp.dot(h.astype(w_fc_ref.dtype), w_fc_ref[...],
                         preferred_element_type=jnp.float32)
        logits_ref[...] = (logits + b_fc_ref[...]).astype(logits_ref.dtype)


# -----------------------------------------------------------------------------
# Tile / VMEM-budget selection (trace-time Python)
# -----------------------------------------------------------------------------
def _vmem_budget_bytes():
    """Generation-aware budget: leave headroom on 64 MiB (v7x) parts."""
    try:
        cap = int(getattr(pltpu.get_tpu_info(), "vmem_capacity_bytes",
                          128 * 1024 * 1024))
    except Exception:
        cap = 128 * 1024 * 1024
    if cap <= 64 * 1024 * 1024:
        return 52 * 1024 * 1024          # v7x-class: headroom for scratch/sems
    return 100 * 1024 * 1024             # 128 MiB parts (v5e / v6e)


def _footprint(bm, bk, E, C, xbytes, wbytes):
    stream = 2 * (bm * bk * xbytes          # x tile (double-buffered)
                  + bk * E * wbytes         # w_proj tile (double-buffered)
                  + bm * C * 4)             # output tile (double-buffered)
    resident = (3 * E * E + E * C) * wbytes + (4 * E + C) * 4  # Buffered(1)
    scratch = bm * E * 4                    # f32 accumulator
    return stream + resident + scratch


def _choose_tiles(B, K, E, C, block_m, block_k, xbytes, wbytes, budget):
    B16 = _round_up(B, _SUBLANE_BF16)
    bm = min(_round_up(block_m, _SUBLANE_BF16), B16)
    # Give the "parallel" batch axis at least 2 tiles when the batch allows it
    # (keeps the second v7x TensorCore busy; harmless on 1-TC parts).
    if B16 >= 2 * _SUBLANE_BF16 and B16 // bm < 2:
        bm = _round_up(-(-B16 // 2), _SUBLANE_BF16)

    bk = _round_up(min(block_k, K), _LANE)

    # Shrink bk first, then bm, until the footprint fits the budget.
    while _footprint(bm, bk, E, C, xbytes, wbytes) > budget:
        if bk > _LANE:
            bk = max(_LANE, _round_up(bk // 2, _LANE))
        elif bm > _SUBLANE_BF16:
            bm = max(_SUBLANE_BF16, _round_up(bm // 2, _SUBLANE_BF16))
        else:
            break
    return bm, bk


# -----------------------------------------------------------------------------
# Wrapper
# -----------------------------------------------------------------------------
@functools.partial(jax.jit,
                   static_argnames=("num_classes", "block_m", "block_k"))
def tfidf_cls_logits(x, params, *, num_classes, block_m=1024, block_k=2048):
    """logits = fc(relu_stack(proj(x))) on lane-padded parameters."""
    B, token_size = x.shape
    K, E = params["w_proj"].shape            # lane-padded (token_size, embed)
    C = params["w_fc"].shape[1]               # lane-padded num_classes
    assert K >= token_size and K % _LANE == 0
    assert E % _LANE == 0 and C % _LANE == 0

    x_dtype = params["w_proj"].dtype
    xbytes = jnp.dtype(x_dtype).itemsize
    wbytes = jnp.dtype(params["w_proj"].dtype).itemsize

    budget = _vmem_budget_bytes()
    bm, bk = _choose_tiles(B, K, E, C, block_m, block_k, xbytes, wbytes,
                           budget)

    B_pad = _round_up(B, bm)
    K_pad = _round_up(K, bk)        # zeros are exact (zero weight rows)

    # x: single fused cast(+pad).  Skip the pad entirely when already aligned.
    xp = x.astype(x_dtype)
    if B_pad != B or K_pad != token_size:
        xp = jnp.pad(xp, ((0, B_pad - B), (0, K_pad - token_size)))

    # w_proj: pad rows with zeros only if bk does not divide K.
    w_proj = params["w_proj"]
    if K_pad != K:
        w_proj = jnp.pad(w_proj, ((0, K_pad - K), (0, 0)))

    grid = (B_pad // bm, K_pad // bk)

    def rep(shape):
        # Constant block index -> resident weight; single-buffered.
        try:
            return pl.BlockSpec(shape, lambda i, k: (0, 0),
                                pipeline_mode=pl.Buffered(1))
        except TypeError:
            return pl.BlockSpec(shape, lambda i, k: (0, 0))

    in_specs = [
        pl.BlockSpec((bm, bk), lambda i, k: (i, k)),          # x tile
        pl.BlockSpec((bk, E), lambda i, k: (k, 0)),           # w_proj tile
        rep((1, E)),                                          # b_proj
        rep((E, E)), rep((1, E)),                             # layer 1
        rep((E, E)), rep((1, E)),                             # layer 2
        rep((E, E)), rep((1, E)),                             # layer 3
        rep((E, C)), rep((1, C)),                             # fc
    ]
    out_specs = pl.BlockSpec((bm, C), lambda i, k: (i, 0))

    est = _footprint(bm, bk, E, C, xbytes, wbytes)
    vmem_limit = min(max(int(est * 3 // 2), 32 * 1024 * 1024), budget)

    grid_m = B_pad // bm
    flops = 2 * B_pad * (K_pad * E + 3 * E * E + E * C)
    bytes_accessed = (B_pad * K_pad * xbytes            # x
                      + B_pad * C * 4                   # logits
                      + grid_m * K_pad * E * wbytes     # w_proj re-streamed
                      + (3 * E * E + E * C) * wbytes    # resident weights
                      + (4 * E + C) * 4)                # biases

    logits_pad = pl.pallas_call(
        _mlp_kernel,
        out_shape=jax.ShapeDtypeStruct((B_pad, C), jnp.float32),
        grid_spec=pltpu.PrefetchScalarGridSpec(
            num_scalar_prefetch=0,
            grid=grid,
            in_specs=in_specs,
            out_specs=out_specs,
            scratch_shapes=[pltpu.VMEM((bm, E), jnp.float32)]),
        compiler_params=pltpu.CompilerParams(
            dimension_semantics=("parallel", "arbitrary"),
            vmem_limit_bytes=vmem_limit),
        cost_estimate=pl.CostEstimate(
            flops=flops, transcendentals=0, bytes_accessed=bytes_accessed),
    )(
        xp,
        w_proj, params["b_proj"],
        params["w1"], params["b1"],
        params["w2"], params["b2"],
        params["w3"], params["b3"],
        params["w_fc"], params["b_fc"],
    )
    return logits_pad[:B, :num_classes]


def tfidf_cls_forward(x, params, labels=None, *, num_classes,
                      block_m=1024, block_k=2048):
    """Mirrors TFIDFCLSModel.forward: returns (logits,) or (loss, logits)."""
    logits = tfidf_cls_logits(x, params, num_classes=num_classes,
                              block_m=block_m, block_k=block_k)
    if labels is None:
        return (logits,)
    # CrossEntropyLoss (mean reduction) on the small logits — plain JAX glue.
    logp = jax.nn.log_softmax(logits, axis=-1)
    nll = -jnp.take_along_axis(logp, labels[:, None], axis=-1)[:, 0]
    return (jnp.mean(nll), logits)


# -----------------------------------------------------------------------------
# Parameters: PyTorch nn.Linear-style init, then pad/cast once for the kernel
# -----------------------------------------------------------------------------
# TODO(synk): the embed_size=None configuration (proj_layer = nn.Identity) is
# not covered; this implementation assumes an explicit embed_size.
def init_params(key, token_size, embed_size, num_classes):
    def linear(key, fan_in, fan_out):
        kw, kb = jax.random.split(key)
        bound = 1.0 / jnp.sqrt(float(fan_in))
        w = jax.random.uniform(kw, (fan_in, fan_out), jnp.float32, -bound, bound)
        b = jax.random.uniform(kb, (1, fan_out), jnp.float32, -bound, bound)
        return w, b

    keys = jax.random.split(key, 5)
    w_proj, b_proj = linear(keys[0], token_size, embed_size)
    w1, b1 = linear(keys[1], embed_size, embed_size)
    w2, b2 = linear(keys[2], embed_size, embed_size)
    w3, b3 = linear(keys[3], embed_size, embed_size)
    w_fc, b_fc = linear(keys[4], embed_size, num_classes)
    return dict(w_proj=w_proj, b_proj=b_proj, w1=w1, b1=b1, w2=w2, b2=b2,
                w3=w3, b3=b3, w_fc=w_fc, b_fc=b_fc)


def prepare_params(raw, weight_dtype=jnp.bfloat16):
    """Zero-pad every feature dim to a multiple of 128 and cast weights.

    Padding is exact: padded input columns hit zero weight rows, padded hidden
    units have zero weights + zero bias (ReLU(0) == 0) and contribute nothing
    downstream, padded class columns are sliced off in the wrapper.
    """
    token_size, embed = raw["w_proj"].shape
    num_classes = raw["w_fc"].shape[1]
    K = _round_up(token_size, _LANE)
    E = _round_up(embed, _LANE)
    C = _round_up(num_classes, _LANE)

    def pad(a, rows, cols, dtype):
        out = jnp.zeros((rows, cols), dtype)
        return out.at[:a.shape[0], :a.shape[1]].set(a.astype(dtype))

    return dict(
        w_proj=pad(raw["w_proj"], K, E, weight_dtype),
        b_proj=pad(raw["b_proj"], 1, E, jnp.float32),
        w1=pad(raw["w1"], E, E, weight_dtype),
        b1=pad(raw["b1"], 1, E, jnp.float32),
        w2=pad(raw["w2"], E, E, weight_dtype),
        b2=pad(raw["b2"], 1, E, jnp.float32),
        w3=pad(raw["w3"], E, E, weight_dtype),
        b3=pad(raw["b3"], 1, E, jnp.float32),
        w_fc=pad(raw["w_fc"], E, C, weight_dtype),
        b_fc=pad(raw["b_fc"], 1, C, jnp.float32),
    )


# -----------------------------------------------------------------------------
# Pure-JAX reference that mirrors the kernel numerics (bf16 x + weights,
# f32 accumulation) for the sanity check.
# -----------------------------------------------------------------------------
def reference_logits(x, p, num_classes):
    wd = p["w_proj"].dtype
    T = x.shape[1]
    K = p["w_proj"].shape[0]
    xb = jnp.pad(x.astype(wd), ((0, 0), (0, K - T)))
    h = jnp.dot(xb, p["w_proj"], preferred_element_type=jnp.float32) + p["b_proj"]
    for w, b in ((p["w1"], p["b1"]), (p["w2"], p["b2"]), (p["w3"], p["b3"])):
        h = jnp.dot(h.astype(wd), w, preferred_element_type=jnp.float32) + b
        h = jnp.maximum(h, 0.0)
    logits = jnp.dot(h.astype(wd), p["w_fc"],
                     preferred_element_type=jnp.float32) + p["b_fc"]
    return logits[:, :num_classes]


if __name__ == "__main__":
    key = jax.random.PRNGKey(0)
    k_x, k_p, k_l = jax.random.split(key, 3)

    batch = 8
    token_size = 32     # tf-idf vocabulary / feature size (toy)
    embed_size = 16
    num_classes = 8

    # tf-idf style non-negative features
    x = jax.random.uniform(k_x, (batch, token_size), jnp.float32)
    labels = jax.random.randint(k_l, (batch,), 0, num_classes)

    raw_params = init_params(k_p, token_size, embed_size, num_classes)
    params = prepare_params(raw_params)   # pad to 128 lanes, weights -> bf16

    # inference path
    (logits,) = tfidf_cls_forward(x, params, num_classes=num_classes)
    logits = jax.block_until_ready(logits)

    # training path (loss, logits)
    loss, logits2 = tfidf_cls_forward(x, params, labels=labels,
                                      num_classes=num_classes)
    loss = jax.block_until_ready(loss)

    # sanity checks
    ref = reference_logits(x, params, num_classes)
    assert logits.shape == (batch, num_classes)
    assert jnp.allclose(logits, ref, atol=1e-2, rtol=1e-2), "mismatch vs ref"
    assert jnp.isfinite(loss), "loss not finite"

    print("KERNEL_OK")
</pallas_src>

<mosaic_0001>
module attributes {stable_mosaic.version = 11 : i64} {
  func.func @_mlp_kernel(%arg0: i32, %arg1: i32, %arg2: memref<16x128xbf16, #tpu.memory_space<vmem>>, %arg3: memref<128x128xbf16, #tpu.memory_space<vmem>>, %arg4: memref<1x128xf32, #tpu.memory_space<vmem>>, %arg5: memref<128x128xbf16, #tpu.memory_space<vmem>>, %arg6: memref<1x128xf32, #tpu.memory_space<vmem>>, %arg7: memref<128x128xbf16, #tpu.memory_space<vmem>>, %arg8: memref<1x128xf32, #tpu.memory_space<vmem>>, %arg9: memref<128x128xbf16, #tpu.memory_space<vmem>>, %arg10: memref<1x128xf32, #tpu.memory_space<vmem>>, %arg11: memref<128x128xbf16, #tpu.memory_space<vmem>>, %arg12: memref<1x128xf32, #tpu.memory_space<vmem>>, %arg13: memref<16x128xf32, #tpu.memory_space<vmem>>, %arg14: memref<16x128xf32, #tpu.memory_space<vmem>>) attributes {dimension_semantics = [#tpu.dimension_semantics<parallel>, #tpu.dimension_semantics<arbitrary>], iteration_bounds = array<i64: 1, 1>, scalar_prefetch = 0 : i64, scratch_operands = 1 : i64, tpu.core_type = #tpu.core_type<tc>, window_params = [{transform_indices = @transform_0, window_bounds = array<i64: 16, 128>}, {transform_indices = @transform_1, window_bounds = array<i64: 128, 128>}, {pipeline_mode = #tpu.pipeline_mode<synchronous>, transform_indices = @transform_2, window_bounds = array<i64: 1, 128>}, {pipeline_mode = #tpu.pipeline_mode<synchronous>, transform_indices = @transform_3, window_bounds = array<i64: 128, 128>}, {pipeline_mode = #tpu.pipeline_mode<synchronous>, transform_indices = @transform_4, window_bounds = array<i64: 1, 128>}, {pipeline_mode = #tpu.pipeline_mode<synchronous>, transform_indices = @transform_5, window_bounds = array<i64: 128, 128>}, {pipeline_mode = #tpu.pipeline_mode<synchronous>, transform_indices = @transform_6, window_bounds = array<i64: 1, 128>}, {pipeline_mode = #tpu.pipeline_mode<synchronous>, transform_indices = @transform_7, window_bounds = array<i64: 128, 128>}, {pipeline_mode = #tpu.pipeline_mode<synchronous>, transform_indices = @transform_8, window_bounds = array<i64: 1, 128>}, {pipeline_mode = #tpu.pipeline_mode<synchronous>, transform_indices = @transform_9, window_bounds = array<i64: 128, 128>}, {pipeline_mode = #tpu.pipeline_mode<synchronous>, transform_indices = @transform_10, window_bounds = array<i64: 1, 128>}, {transform_indices = @transform_11, window_bounds = array<i64: 16, 128>}]} {
    %c0 = arith.constant 0 : index
    %c0_0 = arith.constant 0 : index
    %0 = vector.load %arg2[%c0, %c0_0] : memref<16x128xbf16, #tpu.memory_space<vmem>>, vector<16x128xbf16>
    %c0_1 = arith.constant 0 : index
    %c0_2 = arith.constant 0 : index
    %1 = vector.load %arg3[%c0_1, %c0_2] : memref<128x128xbf16, #tpu.memory_space<vmem>>, vector<128x128xbf16>
    %cst = arith.constant dense<0.000000e+00> : vector<16x128xf32>
    %2 = tpu.matmul %0, %1, %cst {dimension_numbers = #tpu.dot_dimension_numbers<[1], [0], [0], [1], [0, 0, 1, 1], [], []>} : vector<16x128xbf16>, vector<128x128xbf16>, vector<16x128xf32> -> vector<16x128xf32>
    %c0_i32 = arith.constant 0 : i32
    %3 = arith.cmpi eq, %arg1, %c0_i32 : i32
    %4 = arith.extui %3 : i1 to i32
    %c0_i32_3 = arith.constant 0 : i32
    %5 = arith.cmpi ne, %4, %c0_i32_3 : i32
    scf.if %5 {
      %c0_8 = arith.constant 0 : index
      %c0_9 = arith.constant 0 : index
      %12 = vector.load %arg4[%c0_8, %c0_9] : memref<1x128xf32, #tpu.memory_space<vmem>>, vector<1x128xf32>
      %13 = vector.broadcast %12 : vector<1x128xf32> to vector<16x128xf32>
      %14 = arith.addf %2, %13 : vector<16x128xf32>
      %c0_10 = arith.constant 0 : index
      %c0_11 = arith.constant 0 : index
      %15 = vector.load %arg14[%c0_10, %c0_11] : memref<16x128xf32, #tpu.memory_space<vmem>>, vector<16x128xf32>
      tpu.vector_store %arg14[%c0_10, %c0_11], %14 {strides = array<i32>} : memref<16x128xf32, #tpu.memory_space<vmem>>, vector<16x128xf32>,
    } else {
    }
    %c0_i32_4 = arith.constant 0 : i32
    %6 = arith.cmpi ne, %arg1, %c0_i32_4 : i32
    %7 = arith.extui %6 : i1 to i32
    %c0_i32_5 = arith.constant 0 : i32
    %8 = arith.cmpi ne, %7, %c0_i32_5 : i32
    scf.if %8 {
      %c0_8 = arith.constant 0 : index
      %c0_9 = arith.constant 0 : index
      %12 = vector.load %arg14[%c0_8, %c0_9] : memref<16x128xf32, #tpu.memory_space<vmem>>, vector<16x128xf32>
      %13 = arith.addf %12, %2 : vector<16x128xf32>
      %c0_10 = arith.constant 0 : index
      %c0_11 = arith.constant 0 : index
      %14 = vector.load %arg14[%c0_10, %c0_11] : memref<16x128xf32, #tpu.memory_space<vmem>>, vector<16x128xf32>
      tpu.vector_store %arg14[%c0_10, %c0_11], %13 {strides = array<i32>} : memref<16x128xf32, #tpu.memory_space<vmem>>, vector<16x128xf32>,
    } else {
    }
    %c0_i32_6 = arith.constant 0 : i32
    %9 = arith.cmpi eq, %arg1, %c0_i32_6 : i32
    %10 = arith.extui %9 : i1 to i32
    %c0_i32_7 = arith.constant 0 : i32
    %11 = arith.cmpi ne, %10, %c0_i32_7 : i32
    scf.if %11 {
      %c0_8 = arith.constant 0 : index
      %c0_9 = arith.constant 0 : index
      %12 = vector.load %arg14[%c0_8, %c0_9] : memref<16x128xf32, #tpu.memory_space<vmem>>, vector<16x128xf32>
      %13 = arith.truncf %12 : vector<16x128xf32> to vector<16x128xbf16>
      %c0_10 = arith.constant 0 : index
      %c0_11 = arith.constant 0 : index
      %14 = vector.load %arg5[%c0_10, %c0_11] : memref<128x128xbf16, #tpu.memory_space<vmem>>, vector<128x128xbf16>
      %cst_12 = arith.constant dense<0.000000e+00> : vector<16x128xf32>
      %15 = tpu.matmul %13, %14, %cst_12 {dimension_numbers = #tpu.dot_dimension_numbers<[1], [0], [0], [1], [0, 0, 1, 1], [], []>} : vector<16x128xbf16>, vector<128x128xbf16>, vector<16x128xf32> -> vector<16x128xf32>
      %c0_13 = arith.constant 0 : index
      %c0_14 = arith.constant 0 : index
      %16 = vector.load %arg6[%c0_13, %c0_14] : memref<1x128xf32, #tpu.memory_space<vmem>>, vector<1x128xf32>
      %17 = vector.broadcast %16 : vector<1x128xf32> to vector<16x128xf32>
      %18 = arith.addf %15, %17 : vector<16x128xf32>
      %cst_15 = arith.constant 0.000000e+00 : f32
      %19 = vector.broadcast %cst_15 : f32 to vector<16x128xf32>
      %20 = arith.maximumf %18, %19 : vector<16x128xf32>
      %21 = arith.truncf %20 : vector<16x128xf32> to vector<16x128xbf16>
      %c0_16 = arith.constant 0 : index
      %c0_17 = arith.constant 0 : index
      %22 = vector.load %arg7[%c0_16, %c0_17] : memref<128x128xbf16, #tpu.memory_space<vmem>>, vector<128x128xbf16>
      %cst_18 = arith.constant dense<0.000000e+00> : vector<16x128xf32>
      %23 = tpu.matmul %21, %22, %cst_18 {dimension_numbers = #tpu.dot_dimension_numbers<[1], [0], [0], [1], [0, 0, 1, 1], [], []>} : vector<16x128xbf16>, vector<128x128xbf16>, vector<16x128xf32> -> vector<16x128xf32>
      %c0_19 = arith.constant 0 : index
      %c0_20 = arith.constant 0 : index
      %24 = vector.load %arg8[%c0_19, %c0_20] : memref<1x128xf32, #tpu.memory_space<vmem>>, vector<1x128xf32>
      %25 = vector.broadcast %24 : vector<1x128xf32> to vector<16x128xf32>
      %26 = arith.addf %23, %25 : vector<16x128xf32>
      %cst_21 = arith.constant 0.000000e+00 : f32
      %27 = vector.broadcast %cst_21 : f32 to vector<16x128xf32>
      %28 = arith.maximumf %26, %27 : vector<16x128xf32>
      %29 = arith.truncf %28 : vector<16x128xf32> to vector<16x128xbf16>
      %c0_22 = arith.constant 0 : index
      %c0_23 = arith.constant 0 : index
      %30 = vector.load %arg9[%c0_22, %c0_23] : memref<128x128xbf16, #tpu.memory_space<vmem>>, vector<128x128xbf16>
      %cst_24 = arith.constant dense<0.000000e+00> : vector<16x128xf32>
      %31 = tpu.matmul %29, %30, %cst_24 {dimension_numbers = #tpu.dot_dimension_numbers<[1], [0], [0], [1], [0, 0, 1, 1], [], []>} : vector<16x128xbf16>, vector<128x128xbf16>, vector<16x128xf32> -> vector<16x128xf32>
      %c0_25 = arith.constant 0 : index
      %c0_26 = arith.constant 0 : index
      %32 = vector.load %arg10[%c0_25, %c0_26] : memref<1x128xf32, #tpu.memory_space<vmem>>, vector<1x128xf32>
      %33 = vector.broadcast %32 : vector<1x128xf32> to vector<16x128xf32>
      %34 = arith.addf %31, %33 : vector<16x128xf32>
      %cst_27 = arith.constant 0.000000e+00 : f32
      %35 = vector.broadcast %cst_27 : f32 to vector<16x128xf32>
      %36 = arith.maximumf %34, %35 : vector<16x128xf32>
      %37 = arith.truncf %36 : vector<16x128xf32> to vector<16x128xbf16>
      %c0_28 = arith.constant 0 : index
      %c0_29 = arith.constant 0 : index
      %38 = vector.load %arg11[%c0_28, %c0_29] : memref<128x128xbf16, #tpu.memory_space<vmem>>, vector<128x128xbf16>
      %cst_30 = arith.constant dense<0.000000e+00> : vector<16x128xf32>
      %39 = tpu.matmul %37, %38, %cst_30 {dimension_numbers = #tpu.dot_dimension_numbers<[1], [0], [0], [1], [0, 0, 1, 1], [], []>} : vector<16x128xbf16>, vector<128x128xbf16>, vector<16x128xf32> -> vector<16x128xf32>
      %c0_31 = arith.constant 0 : index
      %c0_32 = arith.constant 0 : index
      %40 = vector.load %arg12[%c0_31, %c0_32] : memref<1x128xf32, #tpu.memory_space<vmem>>, vector<1x128xf32>
      %41 = vector.broadcast %40 : vector<1x128xf32> to vector<16x128xf32>
      %42 = arith.addf %39, %41 : vector<16x128xf32>
      %c0_33 = arith.constant 0 : index
      %c0_34 = arith.constant 0 : index
      %43 = vector.load %arg13[%c0_33, %c0_34] : memref<16x128xf32, #tpu.memory_space<vmem>>, vector<16x128xf32>
      tpu.vector_store %arg13[%c0_33, %c0_34], %42 {strides = array<i32>} : memref<16x128xf32, #tpu.memory_space<vmem>>, vector<16x128xf32>,
    } else {
    }
    return
  }
  func.func @transform_0(%arg0: i32, %arg1: i32) -> (i32, i32) {
    %c0_i32 = arith.constant 0 : i32
    return %arg0, %arg1 : i32, i32
  }
  func.func @transform_1(%arg0: i32, %arg1: i32) -> (i32, i32) {
    %c0_i32 = arith.constant 0 : i32
    %c0_i32_0 = arith.constant 0 : i32
    return %arg1, %c0_i32 : i32, i32
  }
  func.func @transform_2(%arg0: i32, %arg1: i32) -> (i32, i32) {
    %c0_i32 = arith.constant 0 : i32
    %c0_i32_0 = arith.constant 0 : i32
    %c0_i32_1 = arith.constant 0 : i32
    return %c0_i32, %c0_i32_0 : i32, i32
  }
  func.func @transform_3(%arg0: i32, %arg1: i32) -> (i32, i32) {
    %c0_i32 = arith.constant 0 : i32
    %c0_i32_0 = arith.constant 0 : i32
    %c0_i32_1 = arith.constant 0 : i32
    return %c0_i32, %c0_i32_0 : i32, i32
  }
  func.func @transform_4(%arg0: i32, %arg1: i32) -> (i32, i32) {
    %c0_i32 = arith.constant 0 : i32
    %c0_i32_0 = arith.constant 0 : i32
    %c0_i32_1 = arith.constant 0 : i32
    return %c0_i32, %c0_i32_0 : i32, i32
  }
  func.func @transform_5(%arg0: i32, %arg1: i32) -> (i32, i32) {
    %c0_i32 = arith.constant 0 : i32
    %c0_i32_0 = arith.constant 0 : i32
    %c0_i32_1 = arith.constant 0 : i32
    return %c0_i32, %c0_i32_0 : i32, i32
  }
  func.func @transform_6(%arg0: i32, %arg1: i32) -> (i32, i32) {
    %c0_i32 = arith.constant 0 : i32
    %c0_i32_0 = arith.constant 0 : i32
    %c0_i32_1 = arith.constant 0 : i32
    return %c0_i32, %c0_i32_0 : i32, i32
  }
  func.func @transform_7(%arg0: i32, %arg1: i32) -> (i32, i32) {
    %c0_i32 = arith.constant 0 : i32
    %c0_i32_0 = arith.constant 0 : i32
    %c0_i32_1 = arith.constant 0 : i32
    return %c0_i32, %c0_i32_0 : i32, i32
  }
  func.func @transform_8(%arg0: i32, %arg1: i32) -> (i32, i32) {
    %c0_i32 = arith.constant 0 : i32
    %c0_i32_0 = arith.constant 0 : i32
    %c0_i32_1 = arith.constant 0 : i32
    return %c0_i32, %c0_i32_0 : i32, i32
  }
  func.func @transform_9(%arg0: i32, %arg1: i32) -> (i32, i32) {
    %c0_i32 = arith.constant 0 : i32
    %c0_i32_0 = arith.constant 0 : i32
    %c0_i32_1 = arith.constant 0 : i32
    return %c0_i32, %c0_i32_0 : i32, i32
  }
  func.func @transform_10(%arg0: i32, %arg1: i32) -> (i32, i32) {
    %c0_i32 = arith.constant 0 : i32
    %c0_i32_0 = arith.constant 0 : i32
    %c0_i32_1 = arith.constant 0 : i32
    return %c0_i32, %c0_i32_0 : i32, i32
  }
  func.func @transform_11(%arg0: i32, %arg1: i32) -> (i32, i32) {
    %c0_i32 = arith.constant 0 : i32
    %c0_i32_0 = arith.constant 0 : i32
    return %arg0, %c0_i32 : i32, i32
  }
}

</mosaic_0001>

<llo_original>
// kernel: tfidf_cls_logits.1
$region0: #{tfidf_cls_logits.1}
  #allocation0 [shape = 'u32[]', space=smem, size = 0x4, offset = 0x4, fixed_abs, tag = 'smem constant byte address 0x4 - core index']
  #allocation1 [shape = 'u32[144,128]{1,0:T(1,128)}', space=vmem, size = 0x12000, scoped, tag = 'internal scratch']
  #allocation2 [shape = 'f32[16,128]{1,0:T(8,128)}', space=vmem, size = 0x2000, scoped, tag = 'scratch operand']
  %s0 = inlined_call_operand.vmem [shape: bf16[16,128], index: 0, kind: input, shape index: {}]
  %s1 = inlined_call_operand.hbm [shape: bf16[128,128], index: 1, kind: input, shape index: {}]
  %s2 = inlined_call_operand.vmem [shape: f32[1,128], index: 2, kind: input, shape index: {}]
  %s3 = inlined_call_operand.hbm [shape: bf16[128,128], index: 3, kind: input, shape index: {}]
  %s4 = inlined_call_operand.vmem [shape: f32[1,128], index: 4, kind: input, shape index: {}]
  %s5 = inlined_call_operand.hbm [shape: bf16[128,128], index: 5, kind: input, shape index: {}]
  %s6 = inlined_call_operand.vmem [shape: f32[1,128], index: 6, kind: input, shape index: {}]
  %s7 = inlined_call_operand.hbm [shape: bf16[128,128], index: 7, kind: input, shape index: {}]
  %s8 = inlined_call_operand.vmem [shape: f32[1,128], index: 8, kind: input, shape index: {}]
  %s9 = inlined_call_operand.hbm [shape: bf16[128,128], index: 9, kind: input, shape index: {}]
  %s10 = inlined_call_operand.vmem [shape: f32[1,128], index: 10, kind: input, shape index: {}]
  %s11 = inlined_call_operand.vmem [shape: f32[16,128], index: 11, kind: output, shape index: {}]
  %s12 = sld [smem:[#allocation0]]
  $region86: #{tfidf_cls_logits.1} parent=0
    _
  %s14 = ssub.s32 1, %s12
  %s15 = scalar_select 0, %s14, %s12
  $region1: #{tfidf_cls_logits.1} parent=0
    #allocation3 [shape = 'u8[32768]{0}', space=vmem, size = 0x8000, scoped, tag = 'input window, operand 1, single buffered']
    #allocation4 [shape = 's32[1]{0}', space=sflag, size = 0x4, scoped, tag = 'scoped memory for tfidf_cls_logits.1']
    #allocation5 [shape = 'u8[32768]{0}', space=vmem, size = 0x8000, scoped, tag = 'input window, operand 3, single buffered']
    #allocation6 [shape = 's32[1]{0}', space=sflag, size = 0x4, scoped, tag = 'scoped memory for tfidf_cls_logits.1']
    #allocation7 [shape = 'u8[32768]{0}', space=vmem, size = 0x8000, scoped, tag = 'input window, operand 5, single buffered']
    #allocation8 [shape = 'u8[32768]{0}', space=vmem, size = 0x8000, scoped, tag = 'input window, operand 7, single buffered']
    #allocation9 [shape = 's32[1]{0}', space=sflag, size = 0x4, scoped, tag = 'scoped memory for tfidf_cls_logits.1']
    #allocation10 [shape = 'u8[32768]{0}', space=vmem, size = 0x8000, scoped, tag = 'input window, operand 9, single buffered']
    %16 = vsyncpa [#allocation4], 0
    %17 = vsyncpa [#allocation6], 0
    %18 = vsyncpa [#allocation9], 0
    // Predicated region
    $region2: #{tfidf_cls_logits.1} parent=1 // pred_check
      _
    $region3: #{tfidf_cls_logits.1} parent=1 // pred_check_branch
      %20 = sbr.rel (0) target = $region5
    $region4: #{tfidf_cls_logits.1} parent=1 // pred_region
      _
    $region5: #{tfidf_cls_logits.1} parent=1 // pred_fallthru
      _
    // Predicated region
    $region6: #{tfidf_cls_logits.1} parent=1 // pred_check
      _
    $region7: #{tfidf_cls_logits.1} parent=1 // pred_check_branch
      %22 = sbr.rel (0) target = $region9
    $region8: #{tfidf_cls_logits.1} parent=1 // pred_region
      %s24 = ssub.s32 1024, 1024
      %25 = vsyncadd [#allocation4], %s24
      %s26 = sshll.u32 [#allocation3], 4
      %s27 = int_to_ptr.vmem [resolvable:$true] %s26
      %32 = dma.hbm_to_vmem [thread:$0]  %s1, 1024, %s27, [#allocation4], 64, 64, 4
    $region9: #{tfidf_cls_logits.1} parent=1 // pred_fallthru
      _
    // Predicated region
    $region10: #{tfidf_cls_logits.1} parent=1 // pred_check
      _
    $region11: #{tfidf_cls_logits.1} parent=1 // pred_check_branch
      %34 = sbr.rel (0) target = $region13
    $region12: #{tfidf_cls_logits.1} parent=1 // pred_region
      _
    $region13: #{tfidf_cls_logits.1} parent=1 // pred_fallthru
      _
    // Predicated region
    $region14: #{tfidf_cls_logits.1} parent=1 // pred_check
      _
    $region15: #{tfidf_cls_logits.1} parent=1 // pred_check_branch
      %36 = sbr.rel (0) target = $region17
    $region16: #{tfidf_cls_logits.1} parent=1 // pred_region
      %s38 = ssub.s32 1024, 1024
      %39 = vsyncadd [#allocation6], %s38
      %s40 = sshll.u32 [#allocation5], 4
      %s41 = int_to_ptr.vmem [resolvable:$true] %s40
      %46 = dma.hbm_to_vmem [thread:$0]  %s3, 1024, %s41, [#allocation6], 64, 64, 4
    $region17: #{tfidf_cls_logits.1} parent=1 // pred_fallthru
      _
    // Predicated region
    $region18: #{tfidf_cls_logits.1} parent=1 // pred_check
      _
    $region19: #{tfidf_cls_logits.1} parent=1 // pred_check_branch
      %48 = sbr.rel (0) target = $region21
    $region20: #{tfidf_cls_logits.1} parent=1 // pred_region
      _
    $region21: #{tfidf_cls_logits.1} parent=1 // pred_fallthru
      _
    // Predicated region
    $region22: #{tfidf_cls_logits.1} parent=1 // pred_check
      _
    $region23: #{tfidf_cls_logits.1} parent=1 // pred_check_branch
      %50 = sbr.rel (0) target = $region25
    $region24: #{tfidf_cls_logits.1} parent=1 // pred_region
      %s52 = ssub.s32 1024, 1024
      %53 = vsyncadd [#allocation6], %s52
      %s54 = sshll.u32 [#allocation7], 4
      %s55 = int_to_ptr.vmem [resolvable:$true] %s54
      %60 = dma.hbm_to_vmem [thread:$0]  %s5, 1024, %s55, [#allocation6], 64, 64, 4
    $region25: #{tfidf_cls_logits.1} parent=1 // pred_fallthru
      _
    // Predicated region
    $region26: #{tfidf_cls_logits.1} parent=1 // pred_check
      _
    $region27: #{tfidf_cls_logits.1} parent=1 // pred_check_branch
      %62 = sbr.rel (0) target = $region29
    $region28: #{tfidf_cls_logits.1} parent=1 // pred_region
      _
    $region29: #{tfidf_cls_logits.1} parent=1 // pred_fallthru
      _
    // Predicated region
    $region30: #{tfidf_cls_logits.1} parent=1 // pred_check
      _
    $region31: #{tfidf_cls_logits.1} parent=1 // pred_check_branch
      %64 = sbr.rel (0) target = $region33
    $region32: #{tfidf_cls_logits.1} parent=1 // pred_region
      %s66 = ssub.s32 1024, 1024
      %67 = vsyncadd [#allocation9], %s66
      %s68 = sshll.u32 [#allocation8], 4
      %s69 = int_to_ptr.vmem [resolvable:$true] %s68
      %74 = dma.hbm_to_vmem [thread:$0]  %s7, 1024, %s69, [#allocation9], 64, 64, 4
    $region33: #{tfidf_cls_logits.1} parent=1 // pred_fallthru
      _
    // Predicated region
    $region34: #{tfidf_cls_logits.1} parent=1 // pred_check
      _
    $region35: #{tfidf_cls_logits.1} parent=1 // pred_check_branch
      %76 = sbr.rel (0) target = $region37
    $region36: #{tfidf_cls_logits.1} parent=1 // pred_region
      _
    $region37: #{tfidf_cls_logits.1} parent=1 // pred_fallthru
      _
    // Predicated region
    $region38: #{tfidf_cls_logits.1} parent=1 // pred_check
      _
    $region39: #{tfidf_cls_logits.1} parent=1 // pred_check_branch
      %78 = sbr.rel (0) target = $region41
    $region40: #{tfidf_cls_logits.1} parent=1 // pred_region
      %s80 = ssub.s32 1024, 1024
      %81 = vsyncadd [#allocation9], %s80
      %s82 = sshll.u32 [#allocation10], 4
      %s83 = int_to_ptr.vmem [resolvable:$true] %s82
      %88 = dma.hbm_to_vmem [thread:$0]  %s9, 1024, %s83, [#allocation9], 64, 64, 4
    $region41: #{tfidf_cls_logits.1} parent=1 // pred_fallthru
      _
    // Predicated region
    $region42: #{tfidf_cls_logits.1} parent=1 // pred_check
      _
    $region43: #{tfidf_cls_logits.1} parent=1 // pred_check_branch
      %90 = sbr.rel (0) target = $region45
    $region44: #{tfidf_cls_logits.1} parent=1 // pred_region
      _
    $region45: #{tfidf_cls_logits.1} parent=1 // pred_fallthru
      _
    // Predicated region
    $region46: #{tfidf_cls_logits.1} parent=1 // pred_check
      _
    $region47: #{tfidf_cls_logits.1} parent=1 // pred_check_branch
      %92 = sbr.rel (0) target = $region49
    $region48: #{tfidf_cls_logits.1} parent=1 // pred_region
      %93 = dma.done [#allocation4], 1024
    $region49: #{tfidf_cls_logits.1} parent=1 // pred_fallthru
      _
    // Predicated region
    $region50: #{tfidf_cls_logits.1} parent=1 // pred_check
      _
    $region51: #{tfidf_cls_logits.1} parent=1 // pred_check_branch
      %95 = sbr.rel (0) target = $region53
    $region52: #{tfidf_cls_logits.1} parent=1 // pred_region
      %96 = dma.done [#allocation6], 1024
    $region53: #{tfidf_cls_logits.1} parent=1 // pred_fallthru
      _
    // Predicated region
    $region54: #{tfidf_cls_logits.1} parent=1 // pred_check
      _
    $region55: #{tfidf_cls_logits.1} parent=1 // pred_check_branch
      %98 = sbr.rel (0) target = $region57
    $region56: #{tfidf_cls_logits.1} parent=1 // pred_region
      %99 = dma.done [#allocation6], 1024
    $region57: #{tfidf_cls_logits.1} parent=1 // pred_fallthru
      _
    // Predicated region
    $region58: #{tfidf_cls_logits.1} parent=1 // pred_check
      _
    $region59: #{tfidf_cls_logits.1} parent=1 // pred_check_branch
      %101 = sbr.rel (0) target = $region61
    $region60: #{tfidf_cls_logits.1} parent=1 // pred_region
      %102 = dma.done [#allocation9], 1024
    $region61: #{tfidf_cls_logits.1} parent=1 // pred_fallthru
      _
    // Predicated region
    $region62: #{tfidf_cls_logits.1} parent=1 // pred_check
      _
    $region63: #{tfidf_cls_logits.1} parent=1 // pred_check_branch
      %104 = sbr.rel (0) target = $region65
    $region64: #{tfidf_cls_logits.1} parent=1 // pred_region
      %105 = dma.done [#allocation9], 1024
    $region65: #{tfidf_cls_logits.1} parent=1 // pred_fallthru
      _
    %v107 = vld [vmem:[%s0] sm:$0xf]
    %v108 = vld [vmem:[%s0 + $0x4] sm:$0xf]
    %v109 = vld [vmem:[#allocation3] sm:$0xf]
    %v110 = vld [vmem:[#allocation3 + $0x4] sm:$0xf]
    %v111 = vld [vmem:[#allocation3 + $0x8] sm:$0xf]
    %v112 = vld [vmem:[#allocation3 + $0xc] sm:$0xf]
    %v113 = vld [vmem:[#allocation3 + $0x10] sm:$0xf]
    %v114 = vld [vmem:[#allocation3 + $0x14] sm:$0xf]
    %v115 = vld [vmem:[#allocation3 + $0x18] sm:$0xf]
    %v116 = vld [vmem:[#allocation3 + $0x1c] sm:$0xf]
    %v117 = vld [vmem:[#allocation3 + $0x20] sm:$0xf]
    %v118 = vld [vmem:[#allocation3 + $0x24] sm:$0xf]
    %v119 = vld [vmem:[#allocation3 + $0x28] sm:$0xf]
    %v120 = vld [vmem:[#allocation3 + $0x2c] sm:$0xf]
    %v121 = vld [vmem:[#allocation3 + $0x30] sm:$0xf]
    %v122 = vld [vmem:[#allocation3 + $0x34] sm:$0xf]
    %v123 = vld [vmem:[#allocation3 + $0x38] sm:$0xf]
    %v124 = vld [vmem:[#allocation3 + $0x3c] sm:$0xf]
    %v127 = vunpack.c.l.b16 %v107
    %v128 = vunpack.c.l.b16 %v108
    %v129 = vpack.c.b16 %v128, %v127
    %v147 = vunpack.c.l.b16 %v109
    %v148 = vunpack.c.l.b16 %v110
    %v149 = vunpack.c.l.b16 %v111
    %v150 = vunpack.c.l.b16 %v112
    %v151 = vunpack.c.l.b16 %v113
    %v152 = vunpack.c.l.b16 %v114
    %v153 = vunpack.c.l.b16 %v115
    %v154 = vunpack.c.l.b16 %v116
    %v155 = vunpack.c.l.b16 %v117
    %v156 = vunpack.c.l.b16 %v118
    %v157 = vunpack.c.l.b16 %v119
    %v158 = vunpack.c.l.b16 %v120
    %v159 = vunpack.c.l.b16 %v121
    %v160 = vunpack.c.l.b16 %v122
    %v161 = vunpack.c.l.b16 %v123
    %v162 = vunpack.c.l.b16 %v124
    %v163 = vpack.c.b16 %v148, %v147
    %v164 = vpack.c.b16 %v150, %v149
    %v165 = vpack.c.b16 %v152, %v151
    %v166 = vpack.c.b16 %v154, %v153
    %v167 = vpack.c.b16 %v156, %v155
    %v168 = vpack.c.b16 %v158, %v157
    %v169 = vpack.c.b16 %v160, %v159
    %v170 = vpack.c.b16 %v162, %v161
    %179 = vmatprep.subr.bf16.mxu0 0
    %180 = vmatpush1.bf16.msra.mxu0 %v170
    %181 = vmatprep.subr.bf16.mxu0 0
    %182 = vmatpush1.bf16.msra.mxu0 %v169
    %183 = vmatprep.subr.bf16.mxu0 0
    %184 = vmatpush1.bf16.msra.mxu0 %v168
    %185 = vmatprep.subr.bf16.mxu0 0
    %186 = vmatpush1.bf16.msra.mxu0 %v167
    %187 = vmatprep.subr.bf16.mxu0 0
    %188 = vmatpush1.bf16.msra.mxu0 %v166
    %189 = vmatprep.subr.bf16.mxu0 0
    %190 = vmatpush1.bf16.msra.mxu0 %v165
    %191 = vmatprep.subr.bf16.mxu0 0
    %192 = vmatpush1.bf16.msra.mxu0 %v164
    %193 = vmatprep.subr.bf16.mxu0 0
    %194 = vmatpush1.bf16.msra.mxu0 %v163
    %195 = vmatprep.subr.bf16.mxu0 0
    %196 = vmatpush2.bf16.msra.mxu0 0
    %197 = vmatprep.subr.bf16.mxu0 0
    %198 = vmatpush2.bf16.msra.mxu0 0
    %199 = vmatprep.subr.bf16.mxu0 0
    %200 = vmatpush2.bf16.msra.mxu0 0
    %201 = vmatprep.subr.bf16.mxu0 0
    %202 = vmatpush2.bf16.msra.mxu0 0
    %203 = vmatprep.subr.bf16.mxu0 0
    %204 = vmatpush2.bf16.msra.mxu0 0
    %205 = vmatprep.subr.bf16.mxu0 0
    %206 = vmatpush2.bf16.msra.mxu0 0
    %207 = vmatprep.subr.bf16.mxu0 0
    %208 = vmatpush2.bf16.msra.mxu0 0
    %209 = vmatprep.subr.bf16.mxu0 0
    %210 = vmatpush2.bf16.msra.mxu0 0
    %211 = vmatprep.mubr.bf16.mxu0 0
    %212 = vmatmul.mubr.bf16.gmra.mxu0 %v129
    %v213 = vpop.f32.mrf.mxu0
    %v214 = vadd.f32 0.0, %v213
    %v215 = vpop.f32.mrf.mxu0
    %v216 = vpop.f32.mrf.mxu0
    %v217 = vadd.f32 0.0, %v216
    %v218 = vpop.f32.mrf.mxu0
    %219 = vdwg.mxu0
    %p220 = scmp.eq.s32.totalorder 0, 0
    // Predicated region
    $region66: #{tfidf_cls_logits.1} parent=1 // pred_check
      %p221 = pneg %p220
    $region67: #{tfidf_cls_logits.1} parent=1 // pred_check_branch
      %223 = sbr.rel (%p221) target = $region69
    $region68: #{tfidf_cls_logits.1} parent=1 // pred_region
      %v224 = vld [vmem:[%s2] sm:$0x1]
      %v226 = vlaneseq
      %v227 = vshrl.u32 %v226, 7
      %v228 = vsub.s32 0, %v227
      %v229 = vrot.slane %v224, %v228
      %v231 = vadd.f32 %v214, %v229
      %v232 = vadd.f32 %v217, %v229
      %233 = vst [vmem:[#allocation2] sm:$0xff] %v231
      %234 = vst [vmem:[#allocation2 + $0x8] sm:$0xff] %v232
    $region69: #{tfidf_cls_logits.1} parent=1 // pred_fallthru
      _
    %p235 = scmp.ne.s32.totalorder 0, 0
    // Predicated region
    $region70: #{tfidf_cls_logits.1} parent=1 // pred_check
      %p236 = pneg %p235
    $region71: #{tfidf_cls_logits.1} parent=1 // pred_check_branch
      %238 = sbr.rel (%p236) target = $region73
    $region72: #{tfidf_cls_logits.1} parent=1 // pred_region
      %v239 = vld [vmem:[#allocation2] sm:$0xff]
      %v240 = vld [vmem:[#allocation2 + $0x8] sm:$0xff]
      %v241 = vadd.f32 %v239, %v214
      %v242 = vadd.f32 %v240, %v217
      %243 = vst [vmem:[#allocation2] sm:$0xff] %v241
      %244 = vst [vmem:[#allocation2 + $0x8] sm:$0xff] %v242
    $region73: #{tfidf_cls_logits.1} parent=1 // pred_fallthru
      _
    // Predicated region
    $region74: #{tfidf_cls_logits.1} parent=1 // pred_check
      %p245 = pneg %p220
    $region75: #{tfidf_cls_logits.1} parent=1 // pred_check_branch
      %247 = sbr.rel (%p245) target = $region77
    $region76: #{tfidf_cls_logits.1} parent=1 // pred_region
      %v248 = vld [vmem:[#allocation2] sm:$0xff]
      %v249 = vld [vmem:[#allocation2 + $0x8] sm:$0xff]
      %v250 = vpack.c.bf16 %v249, %v248
      %v251 = vld [vmem:[#allocation5] sm:$0xf]
      %v252 = vld [vmem:[#allocation5 + $0x4] sm:$0xf]
      %v253 = vld [vmem:[#allocation5 + $0x8] sm:$0xf]
      %v254 = vld [vmem:[#allocation5 + $0xc] sm:$0xf]
      %v255 = vld [vmem:[#allocation5 + $0x10] sm:$0xf]
      %v256 = vld [vmem:[#allocation5 + $0x14] sm:$0xf]
      %v257 = vld [vmem:[#allocation5 + $0x18] sm:$0xf]
      %v258 = vld [vmem:[#allocation5 + $0x1c] sm:$0xf]
      %v259 = vld [vmem:[#allocation5 + $0x20] sm:$0xf]
      %v260 = vld [vmem:[#allocation5 + $0x24] sm:$0xf]
      %v261 = vld [vmem:[#allocation5 + $0x28] sm:$0xf]
      %v262 = vld [vmem:[#allocation5 + $0x2c] sm:$0xf]
      %v263 = vld [vmem:[#allocation5 + $0x30] sm:$0xf]
      %v264 = vld [vmem:[#allocation5 + $0x34] sm:$0xf]
      %v265 = vld [vmem:[#allocation5 + $0x38] sm:$0xf]
      %v266 = vld [vmem:[#allocation5 + $0x3c] sm:$0xf]
      %v267 = vld [vmem:[%s4] sm:$0x1]
      %v269 = vlaneseq
      %v270 = vshrl.u32 %v269, 7
      %v271 = vsub.s32 0, %v270
      %v272 = vrot.slane %v267, %v271
      %v290 = vunpack.c.l.b16 %v251
      %v291 = vunpack.c.l.b16 %v252
      %v292 = vunpack.c.l.b16 %v253
      %v293 = vunpack.c.l.b16 %v254
      %v294 = vunpack.c.l.b16 %v255
      %v295 = vunpack.c.l.b16 %v256
      %v296 = vunpack.c.l.b16 %v257
      %v297 = vunpack.c.l.b16 %v258
      %v298 = vunpack.c.l.b16 %v259
      %v299 = vunpack.c.l.b16 %v260
      %v300 = vunpack.c.l.b16 %v261
      %v301 = vunpack.c.l.b16 %v262
      %v302 = vunpack.c.l.b16 %v263
      %v303 = vunpack.c.l.b16 %v264
      %v304 = vunpack.c.l.b16 %v265
      %v305 = vunpack.c.l.b16 %v266
      %v306 = vpack.c.b16 %v291, %v290
      %v307 = vpack.c.b16 %v293, %v292
      %v308 = vpack.c.b16 %v295, %v294
      %v309 = vpack.c.b16 %v297, %v296
      %v310 = vpack.c.b16 %v299, %v298
      %v311 = vpack.c.b16 %v301, %v300
      %v312 = vpack.c.b16 %v303, %v302
      %v313 = vpack.c.b16 %v305, %v304
      %322 = vmatprep.subr.bf16.mxu0 0
      %323 = vmatpush1.bf16.msra.mxu0 %v313
      %324 = vmatprep.subr.bf16.mxu0 0
      %325 = vmatpush1.bf16.msra.mxu0 %v312
      %326 = vmatprep.subr.bf16.mxu0 0
      %327 = vmatpush1.bf16.msra.mxu0 %v311
      %328 = vmatprep.subr.bf16.mxu0 0
      %329 = vmatpush1.bf16.msra.mxu0 %v310
      %330 = vmatprep.subr.bf16.mxu0 0
      %331 = vmatpush1.bf16.msra.mxu0 %v309
      %332 = vmatprep.subr.bf16.mxu0 0
      %333 = vmatpush1.bf16.msra.mxu0 %v308
      %334 = vmatprep.subr.bf16.mxu0 0
      %335 = vmatpush1.bf16.msra.mxu0 %v307
      %336 = vmatprep.subr.bf16.mxu0 0
      %337 = vmatpush1.bf16.msra.mxu0 %v306
      %338 = vmatprep.subr.bf16.mxu0 0
      %339 = vmatpush2.bf16.msra.mxu0 0
      %340 = vmatprep.subr.bf16.mxu0 0
      %341 = vmatpush2.bf16.msra.mxu0 0
      %342 = vmatprep.subr.bf16.mxu0 0
      %343 = vmatpush2.bf16.msra.mxu0 0
      %344 = vmatprep.subr.bf16.mxu0 0
      %345 = vmatpush2.bf16.msra.mxu0 0
      %346 = vmatprep.subr.bf16.mxu0 0
      %347 = vmatpush2.bf16.msra.mxu0 0
      %348 = vmatprep.subr.bf16.mxu0 0
      %349 = vmatpush2.bf16.msra.mxu0 0
      %350 = vmatprep.subr.bf16.mxu0 0
      %351 = vmatpush2.bf16.msra.mxu0 0
      %352 = vmatprep.subr.bf16.mxu0 0
      %353 = vmatpush2.bf16.msra.mxu0 0
      %354 = vmatprep.mubr.bf16.mxu0 0
      %355 = vmatmul.mubr.bf16.gmra.mxu0 %v250
      %v356 = vpop.f32.mrf.mxu0
      %v357 = vadd.f32 %v272, %v356
      %v358 = vpop.f32.mrf.mxu0
      %v359 = vpop.f32.mrf.mxu0
      %v360 = vadd.f32 %v272, %v359
      %v361 = vpop.f32.mrf.mxu0
      %362 = vdwg.mxu0
      %v363 = vmax.f32 %v357, 0.0
      %v364 = vmax.f32 %v360, 0.0
      %v365 = vpack.c.bf16 %v364, %v363
      %v366 = vld [vmem:[#allocation7] sm:$0xf]
      %v367 = vld [vmem:[#allocation7 + $0x4] sm:$0xf]
      %v368 = vld [vmem:[#allocation7 + $0x8] sm:$0xf]
      %v369 = vld [vmem:[#allocation7 + $0xc] sm:$0xf]
      %v370 = vld [vmem:[#allocation7 + $0x10] sm:$0xf]
      %v371 = vld [vmem:[#allocation7 + $0x14] sm:$0xf]
      %v372 = vld [vmem:[#allocation7 + $0x18] sm:$0xf]
      %v373 = vld [vmem:[#allocation7 + $0x1c] sm:$0xf]
      %v374 = vld [vmem:[#allocation7 + $0x20] sm:$0xf]
      %v375 = vld [vmem:[#allocation7 + $0x24] sm:$0xf]
      %v376 = vld [vmem:[#allocation7 + $0x28] sm:$0xf]
      %v377 = vld [vmem:[#allocation7 + $0x2c] sm:$0xf]
      %v378 = vld [vmem:[#allocation7 + $0x30] sm:$0xf]
      %v379 = vld [vmem:[#allocation7 + $0x34] sm:$0xf]
      %v380 = vld [vmem:[#allocation7 + $0x38] sm:$0xf]
      %v381 = vld [vmem:[#allocation7 + $0x3c] sm:$0xf]
      %v382 = vld [vmem:[%s6] sm:$0x1]
      %v384 = vlaneseq
      %v385 = vshrl.u32 %v384, 7
      %v386 = vsub.s32 0, %v385
      %v387 = vrot.slane %v382, %v386
      %v405 = vunpack.c.l.b16 %v366
      %v406 = vunpack.c.l.b16 %v367
      %v407 = vunpack.c.l.b16 %v368
      %v408 = vunpack.c.l.b16 %v369
      %v409 = vunpack.c.l.b16 %v370
      %v410 = vunpack.c.l.b16 %v371
      %v411 = vunpack.c.l.b16 %v372
      %v412 = vunpack.c.l.b16 %v373
      %v413 = vunpack.c.l.b16 %v374
      %v414 = vunpack.c.l.b16 %v375
      %v415 = vunpack.c.l.b16 %v376
      %v416 = vunpack.c.l.b16 %v377
      %v417 = vunpack.c.l.b16 %v378
      %v418 = vunpack.c.l.b16 %v379
      %v419 = vunpack.c.l.b16 %v380
      %v420 = vunpack.c.l.b16 %v381
      %v421 = vpack.c.b16 %v406, %v405
      %v422 = vpack.c.b16 %v408, %v407
      %v423 = vpack.c.b16 %v410, %v409
      %v424 = vpack.c.b16 %v412, %v411
      %v425 = vpack.c.b16 %v414, %v413
      %v426 = vpack.c.b16 %v416, %v415
      %v427 = vpack.c.b16 %v418, %v417
      %v428 = vpack.c.b16 %v420, %v419
      %437 = vmatprep.subr.bf16.mxu0 0
      %438 = vmatpush1.bf16.msra.mxu0 %v428
      %439 = vmatprep.subr.bf16.mxu0 0
      %440 = vmatpush1.bf16.msra.mxu0 %v427
      %441 = vmatprep.subr.bf16.mxu0 0
      %442 = vmatpush1.bf16.msra.mxu0 %v426
      %443 = vmatprep.subr.bf16.mxu0 0
      %444 = vmatpush1.bf16.msra.mxu0 %v425
      %445 = vmatprep.subr.bf16.mxu0 0
      %446 = vmatpush1.bf16.msra.mxu0 %v424
      %447 = vmatprep.subr.bf16.mxu0 0
      %448 = vmatpush1.bf16.msra.mxu0 %v423
      %449 = vmatprep.subr.bf16.mxu0 0
      %450 = vmatpush1.bf16.msra.mxu0 %v422
      %451 = vmatprep.subr.bf16.mxu0 0
      %452 = vmatpush1.bf16.msra.mxu0 %v421
      %453 = vmatprep.subr.bf16.mxu0 0
      %454 = vmatpush2.bf16.msra.mxu0 0
      %455 = vmatprep.subr.bf16.mxu0 0
      %456 = vmatpush2.bf16.msra.mxu0 0
      %457 = vmatprep.subr.bf16.mxu0 0
      %458 = vmatpush2.bf16.msra.mxu0 0
      %459 = vmatprep.subr.bf16.mxu0 0
      %460 = vmatpush2.bf16.msra.mxu0 0
      %461 = vmatprep.subr.bf16.mxu0 0
      %462 = vmatpush2.bf16.msra.mxu0 0
      %463 = vmatprep.subr.bf16.mxu0 0
      %464 = vmatpush2.bf16.msra.mxu0 0
      %465 = vmatprep.subr.bf16.mxu0 0
      %466 = vmatpush2.bf16.msra.mxu0 0
      %467 = vmatprep.subr.bf16.mxu0 0
      %468 = vmatpush2.bf16.msra.mxu0 0
      %469 = vmatprep.mubr.bf16.mxu0 0
      %470 = vmatmul.mubr.bf16.gmra.mxu0 %v365
      %v471 = vpop.f32.mrf.mxu0
      %v472 = vadd.f32 %v387, %v471
      %v473 = vpop.f32.mrf.mxu0
      %v474 = vpop.f32.mrf.mxu0
      %v475 = vadd.f32 %v387, %v474
      %v476 = vpop.f32.mrf.mxu0
      %477 = vdwg.mxu0
      %v478 = vmax.f32 %v472, 0.0
      %v479 = vmax.f32 %v475, 0.0
      %v480 = vpack.c.bf16 %v479, %v478
      %v481 = vld [vmem:[#allocation8] sm:$0xf]
      %v482 = vld [vmem:[#allocation8 + $0x4] sm:$0xf]
      %v483 = vld [vmem:[#allocation8 + $0x8] sm:$0xf]
      %v484 = vld [vmem:[#allocation8 + $0xc] sm:$0xf]
      %v485 = vld [vmem:[#allocation8 + $0x10] sm:$0xf]
      %v486 = vld [vmem:[#allocation8 + $0x14] sm:$0xf]
      %v487 = vld [vmem:[#allocation8 + $0x18] sm:$0xf]
      %v488 = vld [vmem:[#allocation8 + $0x1c] sm:$0xf]
      %v489 = vld [vmem:[#allocation8 + $0x20] sm:$0xf]
      %v490 = vld [vmem:[#allocation8 + $0x24] sm:$0xf]
      %v491 = vld [vmem:[#allocation8 + $0x28] sm:$0xf]
      %v492 = vld [vmem:[#allocation8 + $0x2c] sm:$0xf]
      %v493 = vld [vmem:[#allocation8 + $0x30] sm:$0xf]
      %v494 = vld [vmem:[#allocation8 + $0x34] sm:$0xf]
      %v495 = vld [vmem:[#allocation8 + $0x38] sm:$0xf]
      %v496 = vld [vmem:[#allocation8 + $0x3c] sm:$0xf]
      %v497 = vld [vmem:[%s8] sm:$0x1]
      %v499 = vlaneseq
      %v500 = vshrl.u32 %v499, 7
      %v501 = vsub.s32 0, %v500
      %v502 = vrot.slane %v497, %v501
      %v520 = vunpack.c.l.b16 %v481
      %v521 = vunpack.c.l.b16 %v482
      %v522 = vunpack.c.l.b16 %v483
      %v523 = vunpack.c.l.b16 %v484
      %v524 = vunpack.c.l.b16 %v485
      %v525 = vunpack.c.l.b16 %v486
      %v526 = vunpack.c.l.b16 %v487
      %v527 = vunpack.c.l.b16 %v488
      %v528 = vunpack.c.l.b16 %v489
      %v529 = vunpack.c.l.b16 %v490
      %v530 = vunpack.c.l.b16 %v491
      %v531 = vunpack.c.l.b16 %v492
      %v532 = vunpack.c.l.b16 %v493
      %v533 = vunpack.c.l.b16 %v494
      %v534 = vunpack.c.l.b16 %v495
      %v535 = vunpack.c.l.b16 %v496
      %v536 = vpack.c.b16 %v521, %v520
      %v537 = vpack.c.b16 %v523, %v522
      %v538 = vpack.c.b16 %v525, %v524
      %v539 = vpack.c.b16 %v527, %v526
      %v540 = vpack.c.b16 %v529, %v528
      %v541 = vpack.c.b16 %v531, %v530
      %v542 = vpack.c.b16 %v533, %v532
      %v543 = vpack.c.b16 %v535, %v534
      %552 = vmatprep.subr.bf16.mxu0 0
      %553 = vmatpush1.bf16.msra.mxu0 %v543
      %554 = vmatprep.subr.bf16.mxu0 0
      %555 = vmatpush1.bf16.msra.mxu0 %v542
      %556 = vmatprep.subr.bf16.mxu0 0
      %557 = vmatpush1.bf16.msra.mxu0 %v541
      %558 = vmatprep.subr.bf16.mxu0 0
      %559 = vmatpush1.bf16.msra.mxu0 %v540
      %560 = vmatprep.subr.bf16.mxu0 0
      %561 = vmatpush1.bf16.msra.mxu0 %v539
      %562 = vmatprep.subr.bf16.mxu0 0
      %563 = vmatpush1.bf16.msra.mxu0 %v538
      %564 = vmatprep.subr.bf16.mxu0 0
      %565 = vmatpush1.bf16.msra.mxu0 %v537
      %566 = vmatprep.subr.bf16.mxu0 0
      %567 = vmatpush1.bf16.msra.mxu0 %v536
      %568 = vmatprep.subr.bf16.mxu0 0
      %569 = vmatpush2.bf16.msra.mxu0 0
      %570 = vmatprep.subr.bf16.mxu0 0
      %571 = vmatpush2.bf16.msra.mxu0 0
      %572 = vmatprep.subr.bf16.mxu0 0
      %573 = vmatpush2.bf16.msra.mxu0 0
      %574 = vmatprep.subr.bf16.mxu0 0
      %575 = vmatpush2.bf16.msra.mxu0 0
      %576 = vmatprep.subr.bf16.mxu0 0
      %577 = vmatpush2.bf16.msra.mxu0 0
      %578 = vmatprep.subr.bf16.mxu0 0
      %579 = vmatpush2.bf16.msra.mxu0 0
      %580 = vmatprep.subr.bf16.mxu0 0
      %581 = vmatpush2.bf16.msra.mxu0 0
      %582 = vmatprep.subr.bf16.mxu0 0
      %583 = vmatpush2.bf16.msra.mxu0 0
      %584 = vmatprep.mubr.bf16.mxu0 0
      %585 = vmatmul.mubr.bf16.gmra.mxu0 %v480
      %v586 = vpop.f32.mrf.mxu0
      %v587 = vadd.f32 %v502, %v586
      %v588 = vpop.f32.mrf.mxu0
      %v589 = vpop.f32.mrf.mxu0
      %v590 = vadd.f32 %v502, %v589
      %v591 = vpop.f32.mrf.mxu0
      %592 = vdwg.mxu0
      %v593 = vmax.f32 %v587, 0.0
      %v594 = vmax.f32 %v590, 0.0
      %v595 = vpack.c.bf16 %v594, %v593
      %v596 = vld [vmem:[#allocation10] sm:$0xf]
      %v597 = vld [vmem:[#allocation10 + $0x4] sm:$0xf]
      %v598 = vld [vmem:[#allocation10 + $0x8] sm:$0xf]
      %v599 = vld [vmem:[#allocation10 + $0xc] sm:$0xf]
      %v600 = vld [vmem:[#allocation10 + $0x10] sm:$0xf]
      %v601 = vld [vmem:[#allocation10 + $0x14] sm:$0xf]
      %v602 = vld [vmem:[#allocation10 + $0x18] sm:$0xf]
      %v603 = vld [vmem:[#allocation10 + $0x1c] sm:$0xf]
      %v604 = vld [vmem:[#allocation10 + $0x20] sm:$0xf]
      %v605 = vld [vmem:[#allocation10 + $0x24] sm:$0xf]
      %v606 = vld [vmem:[#allocation10 + $0x28] sm:$0xf]
      %v607 = vld [vmem:[#allocation10 + $0x2c] sm:$0xf]
      %v608 = vld [vmem:[#allocation10 + $0x30] sm:$0xf]
      %v609 = vld [vmem:[#allocation10 + $0x34] sm:$0xf]
      %v610 = vld [vmem:[#allocation10 + $0x38] sm:$0xf]
      %v611 = vld [vmem:[#allocation10 + $0x3c] sm:$0xf]
      %v612 = vld [vmem:[%s10] sm:$0x1]
      %v614 = vlaneseq
      %v615 = vshrl.u32 %v614, 7
      %v616 = vsub.s32 0, %v615
      %v617 = vrot.slane %v612, %v616
      %v635 = vunpack.c.l.b16 %v596
      %v636 = vunpack.c.l.b16 %v597
      %v637 = vunpack.c.l.b16 %v598
      %v638 = vunpack.c.l.b16 %v599
      %v639 = vunpack.c.l.b16 %v600
      %v640 = vunpack.c.l.b16 %v601
      %v641 = vunpack.c.l.b16 %v602
      %v642 = vunpack.c.l.b16 %v603
      %v643 = vunpack.c.l.b16 %v604
      %v644 = vunpack.c.l.b16 %v605
      %v645 = vunpack.c.l.b16 %v606
      %v646 = vunpack.c.l.b16 %v607
      %v647 = vunpack.c.l.b16 %v608
      %v648 = vunpack.c.l.b16 %v609
      %v649 = vunpack.c.l.b16 %v610
      %v650 = vunpack.c.l.b16 %v611
      %v651 = vpack.c.b16 %v636, %v635
      %v652 = vpack.c.b16 %v638, %v637
      %v653 = vpack.c.b16 %v640, %v639
      %v654 = vpack.c.b16 %v642, %v641
      %v655 = vpack.c.b16 %v644, %v643
      %v656 = vpack.c.b16 %v646, %v645
      %v657 = vpack.c.b16 %v648, %v647
      %v658 = vpack.c.b16 %v650, %v649
      %667 = vmatprep.subr.bf16.mxu0 0
      %668 = vmatpush1.bf16.msra.mxu0 %v658
      %669 = vmatprep.subr.bf16.mxu0 0
      %670 = vmatpush1.bf16.msra.mxu0 %v657
      %671 = vmatprep.subr.bf16.mxu0 0
      %672 = vmatpush1.bf16.msra.mxu0 %v656
      %673 = vmatprep.subr.bf16.mxu0 0
      %674 = vmatpush1.bf16.msra.mxu0 %v655
      %675 = vmatprep.subr.bf16.mxu0 0
      %676 = vmatpush1.bf16.msra.mxu0 %v654
      %677 = vmatprep.subr.bf16.mxu0 0
      %678 = vmatpush1.bf16.msra.mxu0 %v653
      %679 = vmatprep.subr.bf16.mxu0 0
      %680 = vmatpush1.bf16.msra.mxu0 %v652
      %681 = vmatprep.subr.bf16.mxu0 0
      %682 = vmatpush1.bf16.msra.mxu0 %v651
      %683 = vmatprep.subr.bf16.mxu0 0
      %684 = vmatpush2.bf16.msra.mxu0 0
      %685 = vmatprep.subr.bf16.mxu0 0
      %686 = vmatpush2.bf16.msra.mxu0 0
      %687 = vmatprep.subr.bf16.mxu0 0
      %688 = vmatpush2.bf16.msra.mxu0 0
      %689 = vmatprep.subr.bf16.mxu0 0
      %690 = vmatpush2.bf16.msra.mxu0 0
      %691 = vmatprep.subr.bf16.mxu0 0
      %692 = vmatpush2.bf16.msra.mxu0 0
      %693 = vmatprep.subr.bf16.mxu0 0
      %694 = vmatpush2.bf16.msra.mxu0 0
      %695 = vmatprep.subr.bf16.mxu0 0
      %696 = vmatpush2.bf16.msra.mxu0 0
      %697 = vmatprep.subr.bf16.mxu0 0
      %698 = vmatpush2.bf16.msra.mxu0 0
      %699 = vmatprep.mubr.bf16.mxu0 0
      %700 = vmatmul.mubr.bf16.gmra.mxu0 %v595
      %v701 = vpop.f32.mrf.mxu0
      %v702 = vadd.f32 %v617, %v701
      %v703 = vpop.f32.mrf.mxu0
      %v704 = vpop.f32.mrf.mxu0
      %v705 = vadd.f32 %v617, %v704
      %v706 = vpop.f32.mrf.mxu0
      %707 = vdwg.mxu0
      %708 = vst [vmem:[%s11] sm:$0xff] %v702
      %709 = vst [vmem:[%s11 + $0x8] sm:$0xff] %v705
    $region77: #{tfidf_cls_logits.1} parent=1 // pred_fallthru
      _
    // Predicated region
    $region78: #{tfidf_cls_logits.1} parent=1 // pred_check
      _
    $region79: #{tfidf_cls_logits.1} parent=1 // pred_check_branch
      %711 = sbr.rel (0) target = $region81
    $region80: #{tfidf_cls_logits.1} parent=1 // pred_region
      _
    $region81: #{tfidf_cls_logits.1} parent=1 // pred_fallthru
      _
    // Predicated region
    $region82: #{tfidf_cls_logits.1} parent=1 // pred_check
      _
    $region83: #{tfidf_cls_logits.1} parent=1 // pred_check_branch
      %713 = sbr.rel (0) target = $region85
    $region84: #{tfidf_cls_logits.1} parent=1 // pred_region
      _
    $region85: #{tfidf_cls_logits.1} parent=1 // pred_fallthru
      _
    %714 = vsyncpa [#allocation4], 1
    %715 = vsyncpa [#allocation6], 1
    %716 = vsyncpa [#allocation9], 1

</llo_original>
